<compile_context>
chip_gen: v7x
topology: tpu7x:2x2x1
jax: 0.10.0
libtpu: 0.0.40
codegen_flags: <defaults>
</compile_context>

<pallas_src>
import functools

import numpy as np
import jax
import jax.numpy as jnp
from jax.experimental import pallas as pl
from jax.experimental.pallas import tpu as pltpu

_BIG = 3.4028235e38   # python floats (NOT jnp scalars -> would be captured as kernel consts)
_PEN = 1.0e12         # cross-batch distance penalty (>> any realistic squared distance)
_PAD_FAR = 1.0e30     # squared "distance" of padded candidate points


def _round_up(x, m):
    return int((int(x) + m - 1) // m) * m


# --------------------------------------------------------------------------------------
# Farthest point sampling: one grid step per batch segment, segment-local [8, Cpad] slab.
# --------------------------------------------------------------------------------------
def _fps_kernel(counts_ref, nsamp_ref, pos_sm_ref, pos_ref, out_ref):
    # counts_ref/nsamp_ref: SMEM [B] int32 ; pos_sm_ref: SMEM [4B, Cpad] f32 (scalar prefetch)
    # pos_ref: VMEM [1, 8, Cpad] f32 (xyz on sublanes 0..2, zero padded)
    # out_ref: VMEM [1, 1, m_max] int32 (segment-LOCAL indices)
    b = pl.program_id(0)
    count = counts_ref[b]
    m_b = nsamp_ref[b]                       # per-segment number of FPS iterations
    Cpad = pos_ref.shape[2]
    m_max = out_ref.shape[2]

    pos = pos_ref[0]                         # [8, Cpad]
    x = pos[0:1, :]
    y = pos[1:2, :]
    z = pos[2:3, :]
    lane = jax.lax.broadcasted_iota(jnp.int32, (1, Cpad), 1)
    # Padded lanes start at -BIG and jnp.minimum keeps them there (their coords are finite
    # zeros), so no per-iteration masking is needed.
    dist0 = jnp.where(lane < count, _BIG, -_BIG).astype(jnp.float32)

    sel_lane = jax.lax.broadcasted_iota(jnp.int32, (1, m_max), 1)
    out0 = jnp.zeros((1, m_max), jnp.int32)  # sample 0 = local index 0
    smrow = 4 * b
    # TODO(synk): torch_cluster fps defaults to random_start=True; we deterministically start
    # from the first point of every batch segment (random_start=False semantics).

    def body(i, carry):
        dist, sel, out_vec = carry
        # Selected point's coordinates come from the SMEM table as 3 scalar reads (off the
        # XLU critical path); the distance update is pure VPU work on [1, Cpad] rows.
        sx = pos_sm_ref[smrow + 0, sel]
        sy = pos_sm_ref[smrow + 1, sel]
        sz = pos_sm_ref[smrow + 2, sel]
        dx = x - sx
        dy = y - sy
        dz = z - sz
        dist = jnp.minimum(dist, dx * dx + dy * dy + dz * dz)
        # Farthest remaining point (first-argmax over lanes).
        # TODO(synk): fuse max + first-argmax into jnp.argmax once its Mosaic lowering on the
        # lane axis is guaranteed; TODO(synk): for multi-thousand-point segments, repack the
        # segment onto all 8 sublanes to cut per-iteration vreg pressure ~8x.
        mx = jnp.max(dist, axis=1, keepdims=True)
        new_sel = jnp.min(jnp.where(dist == mx, lane, Cpad), axis=1, keepdims=True)[0, 0]
        # TODO(synk): replace this (cheap, m_max/128-vreg) select with per-iteration scalar
        # stores into an SMEM output block.
        out_vec = jnp.where(sel_lane == i, new_sel, out_vec)
        return dist, new_sel, out_vec

    _, _, out_vec = jax.lax.fori_loop(
        1, m_b, body, (dist0, jnp.zeros((), jnp.int32), out0))
    out_ref[...] = out_vec[None]


def fps_pallas(pos_seg, pos_sm, counts, nsamp, m_max):
    # pos_seg: [B, 8, Cpad] f32 (VMEM) ; pos_sm: [4B, Cpad] f32 (SMEM via scalar prefetch)
    # counts/nsamp: [B] int32 ; m_max: python int
    B, _, Cpad = pos_seg.shape
    out = pl.pallas_call(
        _fps_kernel,
        out_shape=jax.ShapeDtypeStruct((B, 1, m_max), jnp.int32),
        grid_spec=pltpu.PrefetchScalarGridSpec(
            num_scalar_prefetch=3,
            grid=(B,),
            in_specs=[pl.BlockSpec((1, 8, Cpad), lambda b, c, n, p: (b, 0, 0))],
            out_specs=pl.BlockSpec((1, 1, m_max), lambda b, c, n, p: (b, 0, 0)),
        ),
        compiler_params=pltpu.CompilerParams(dimension_semantics=("parallel",)),
    )(counts, nsamp, pos_sm, pos_seg)
    return out[:, 0, :]                      # [B, m_max] local indices


# --------------------------------------------------------------------------------------
# KNN: grid = (query tiles [parallel], point chunks [arbitrary]).  Distances come out of a
# single transposed-LHS MXU contraction as [CHUNK, TILE_M] (points on sublanes, queries on
# lanes); a running top-k (values in scratch, indices in the resident output block) is merged
# chunk by chunk, and the [k, TILE_M] index blocks are written lane-dense.
# --------------------------------------------------------------------------------------
def _knn_kernel(pts_ref, q_ref, col_ref, vals_ref, *, k, chunk):
    c = pl.program_id(1)

    @pl.when(c == 0)
    def _init():
        vals_ref[...] = jnp.full(vals_ref.shape, _BIG, jnp.float32)
        col_ref[...] = jnp.zeros(col_ref.shape, jnp.int32)

    # Rows of pts/q encode: xyz (0..2), |p|^2 carrier (3), one-hot batch penalty (4..).
    # d = |p|^2 - 2 p.q (+ 2*PEN for cross-batch pairs, ~1e30 for padded points) drops
    # straight out of one matmul -- no mask or p2 passes, and no q^2 term (a per-query
    # constant shift never changes the per-query argmin).
    d = -2.0 * jax.lax.dot_general(
        pts_ref[...], q_ref[...],
        dimension_numbers=(((0,), (0,)), ((), ())),
        preferred_element_type=jnp.float32)                        # [CHUNK, TILE_M]

    row = jax.lax.broadcasted_iota(jnp.int32, (chunk, 1), 0)       # [CHUNK, 1] (no full iota)
    kio = jax.lax.broadcasted_iota(jnp.int32, (k, 1), 0)           # [k, 1]
    base = c * chunk

    run_vals = vals_ref[...]     # running top-k distances from previous chunks
    run_idx = col_ref[...]       # running top-k global indices

    new_vals, new_idx = [], []
    for _ in range(k):
        mn_c = jnp.min(d, axis=0, keepdims=True)                   # [1, TM]
        mn_r = jnp.min(run_vals, axis=0, keepdims=True)            # [1, TM]
        mn = jnp.minimum(mn_c, mn_r)
        # First-occurrence positions; prefer the running entry on ties (smaller global index).
        # TODO(synk): collapse min + first-argmin into jnp.argmin once its sublane-axis Mosaic
        # lowering is guaranteed; the min VALUE is needed anyway for the cross-chunk merge.
        pos_r = jnp.min(jnp.where(run_vals == mn, kio, k), axis=0, keepdims=True)
        pos_c = jnp.min(jnp.where(d == mn, row, chunk), axis=0, keepdims=True)
        take_run = pos_r < k
        idx_r = jnp.sum(jnp.where(kio == pos_r, run_idx, 0), axis=0, keepdims=True)
        sel = jnp.where(take_run, idx_r, base + pos_c).astype(jnp.int32)
        new_vals.append(mn)
        new_idx.append(sel)
        # Exclude the selected entry and continue with the next neighbour.
        run_vals = jnp.where(take_run & (kio == pos_r), _BIG, run_vals)
        d = jnp.where(jnp.logical_not(take_run) & (row == pos_c), _BIG, d)

    vals_ref[...] = jnp.concatenate(new_vals, axis=0)              # [k, TM]
    col_ref[...] = jnp.concatenate(new_idx, axis=0)                # [k, TM] lane-dense store


def knn_pallas(pts_t, q_t, k, tile_m, chunk):
    # pts_t: [R, Npad] f32 ; q_t: [R, Mp] f32  (R = xyz + |p|^2 row + one-hot batch rows)
    R, Npad = pts_t.shape
    _, Mp = q_t.shape
    est = 4 * (2 * R * chunk + 2 * R * tile_m + 4 * k * tile_m + 8 * chunk * tile_m)
    vlim = int(min(max(3 * est, 32 * 1024 * 1024), 48 * 1024 * 1024))
    return pl.pallas_call(
        functools.partial(_knn_kernel, k=k, chunk=chunk),
        out_shape=jax.ShapeDtypeStruct((k, Mp), jnp.int32),
        grid=(Mp // tile_m, Npad // chunk),
        in_specs=[
            pl.BlockSpec((R, chunk), lambda i, c: (0, c)),     # streamed point chunks
            pl.BlockSpec((R, tile_m), lambda i, c: (0, i)),    # query tile, resident across c
        ],
        out_specs=pl.BlockSpec((k, tile_m), lambda i, c: (0, i)),  # resident top-k indices
        scratch_shapes=[pltpu.VMEM((k, tile_m), jnp.float32)],     # running top-k distances
        compiler_params=pltpu.CompilerParams(
            dimension_semantics=("parallel", "arbitrary"),
            vmem_limit_bytes=vlim),
    )(pts_t, q_t)


# --------------------------------------------------------------------------------------
# OverlapSamplingModule.forward
# --------------------------------------------------------------------------------------
def overlap_sampling_forward(pos, batch_np, *, ratio, k, overlap_ratio):
    """pos: [N, 3] f32 device array, batch_np: [N] host int array (sorted by batch)."""
    batch_np = np.asarray(batch_np, dtype=np.int32)
    N = int(pos.shape[0])
    batch = jnp.asarray(batch_np)

    # Static per-batch segment table (shapes must be static on TPU).
    uniq, counts = np.unique(batch_np, return_counts=True)
    starts = np.concatenate([[0], np.cumsum(counts)[:-1]]).astype(np.int32)
    counts = counts.astype(np.int32)
    B = len(uniq)
    nb = int(batch_np.max()) + 1               # one-hot width for the batch-penalty rows

    # torch_cluster fps draws ceil(ratio * segment_size) samples per segment.
    m_base = np.ceil(ratio * counts).astype(np.int32)
    m_extra = np.ceil(overlap_ratio * counts).astype(np.int32)
    # Single FPS pass: greedy FPS with a deterministic start is prefix-consistent, so the
    # overlap samples are the first m_extra entries of the same sample sequence.
    n_samp = np.maximum(m_base, m_extra).astype(np.int32)
    m_max = int(n_samp.max())

    # ----- FPS inputs: per-segment coordinate slabs -----
    Cpad = _round_up(int(counts.max()), 128)
    lane_np = np.arange(Cpad)
    gidx = starts[:, None] + np.minimum(lane_np[None, :], counts[:, None] - 1)   # [B, Cpad]
    valid = (lane_np[None, :] < counts[:, None]).astype(np.float32)              # [B, Cpad]
    seg_xyz = pos[jnp.asarray(gidx)] * jnp.asarray(valid)[:, :, None]            # [B, Cpad, 3]
    seg_t = jnp.transpose(seg_xyz, (0, 2, 1))                                    # [B, 3, Cpad]
    pos_seg = jnp.zeros((B, 8, Cpad), jnp.float32).at[:, :3, :].set(seg_t)       # VMEM operand
    pos_sm = jnp.concatenate(                                                    # SMEM operand
        [seg_t, jnp.zeros((B, 1, Cpad), jnp.float32)], axis=1).reshape(B * 4, Cpad)

    fps_local = fps_pallas(pos_seg, pos_sm, jnp.asarray(counts), jnp.asarray(n_samp), m_max)
    fps_global = fps_local + jnp.asarray(starts)[:, None]
    fps_flat = fps_global.reshape(-1)

    # Flat gathers instead of B tiny slice/concat ops.
    base_sel = np.concatenate(
        [b * m_max + np.arange(int(m_base[b])) for b in range(B)]).astype(np.int32)
    extra_sel = np.concatenate(
        [b * m_max + np.arange(int(m_extra[b])) for b in range(B)]).astype(np.int32)
    base_idx = jnp.take(fps_flat, jnp.asarray(base_sel))
    extra_idx = jnp.take(fps_flat, jnp.asarray(extra_sel))

    overlap_size = int(int(m_base.sum()) * overlap_ratio)          # matches int(len(base)*r)
    combined_idx = jnp.concatenate([base_idx, extra_idx[:overlap_size]])

    # ----- KNN over the combined queries -----
    M = int(combined_idx.shape[0])
    TILE_M = 128 if M <= 128 else 256          # lane-dense query tiles; 256 amortizes step cost
    Mp = _round_up(M, TILE_M)
    CHUNK = min(1024, _round_up(N, 128))       # candidate-point chunk (bounds VMEM; v7x-safe)
    Npad = _round_up(N, CHUNK)
    R = _round_up(4 + nb, 8)                   # rows: xyz, |p|^2 carrier, one-hot batch rows

    q_pos = pos[combined_idx]                  # [M, 3]
    q_batch = batch[combined_idx]              # [M]

    # Candidate points, [R, Npad]: lane-dense, (8,128)-tile exact.
    pts_t = jnp.zeros((R, Npad), jnp.float32)
    pts_t = pts_t.at[:3, :N].set(pos.T)
    pts_t = pts_t.at[3, :N].set(jnp.sum(pos * pos, axis=1))
    pts_t = pts_t.at[3, N:].set(_PAD_FAR)                        # padded points never win
    pts_t = pts_t.at[4 + batch, jnp.arange(N)].set(1.0)          # one-hot batch rows

    # Queries, [R, Mp].  Row 3 = -0.5 turns the |p|^2 row into "+|p|^2" after d = -2*(p.q);
    # rows 4+b carry 0 for the query's own batch and -PEN otherwise, so cross-batch pairs get
    # +2*PEN while same-batch extra terms are exact zeros (no precision loss).
    q_t = jnp.zeros((R, Mp), jnp.float32)
    q_t = q_t.at[:3, :M].set(q_pos.T)
    q_t = q_t.at[3, :].set(-0.5)
    onehot_q = jax.nn.one_hot(q_batch, nb, dtype=jnp.float32)    # [M, nb]
    q_t = q_t.at[4:4 + nb, :M].set(((onehot_q - 1.0) * _PEN).T)

    col_t = knn_pallas(pts_t, q_t, k, TILE_M, CHUNK)             # [k, Mp]
    # TODO(synk): torch_cluster knn emits fewer than k edges when a segment has < k points;
    # this kernel always emits k (falls back to cross-batch/padded candidates, clamped below).
    col = jnp.minimum(jnp.transpose(col_t[:, :M]).reshape(-1), N - 1)  # query-major, asc. dist
    row = jnp.repeat(jnp.arange(M, dtype=jnp.int32), k)          # index into queries
    return combined_idx, (row, col)


if __name__ == "__main__":
    key = jax.random.PRNGKey(0)
    B, N_per = 2, 64
    N = B * N_per
    pos = jax.random.normal(key, (N, 3), dtype=jnp.float32)
    batch = np.repeat(np.arange(B), N_per).astype(np.int32)

    ratio, k, overlap_ratio = 0.5, 8, 0.2
    combined_idx, (row, col) = overlap_sampling_forward(
        pos, batch, ratio=ratio, k=k, overlap_ratio=overlap_ratio
    )
    jax.block_until_ready(combined_idx)
    jax.block_until_ready(row)
    jax.block_until_ready(col)
    print("KERNEL_OK")
</pallas_src>

<mosaic_0001>
module attributes {stable_mosaic.version = 11 : i64} {
  func.func @_fps_kernel(%arg0: i32, %arg1: memref<2xi32, #tpu.memory_space<smem>>, %arg2: memref<2xi32, #tpu.memory_space<smem>>, %arg3: memref<8x128xf32, #tpu.memory_space<smem>>, %arg4: memref<1x8x128xf32, #tpu.memory_space<vmem>>, %arg5: memref<1x1x32xi32, #tpu.memory_space<vmem>>) attributes {dimension_semantics = [#tpu.dimension_semantics<parallel>], iteration_bounds = array<i64: 2>, scalar_prefetch = 3 : i64, scratch_operands = 0 : i64, tpu.core_type = #tpu.core_type<tc>, window_params = [{transform_indices = @transform_0, window_bounds = array<i64: 1, 8, 128>}, {transform_indices = @transform_1, window_bounds = array<i64: 1, 1, 32>}]} {
    %0 = arith.index_cast %arg0 : i32 to index
    %1 = memref.load %arg1[%0] : memref<2xi32, #tpu.memory_space<smem>>
    %2 = arith.index_cast %arg0 : i32 to index
    %3 = memref.load %arg2[%2] : memref<2xi32, #tpu.memory_space<smem>>
    %c0 = arith.constant 0 : index
    %c0_0 = arith.constant 0 : index
    %c0_1 = arith.constant 0 : index
    %4 = vector.load %arg4[%c0, %c0_0, %c0_1] : memref<1x8x128xf32, #tpu.memory_space<vmem>>, vector<1x8x128xf32>
    %5 = vector.shape_cast %4 : vector<1x8x128xf32> to vector<8x128xf32>
    %6 = vector.extract_strided_slice %5 {offsets = [0, 0], sizes = [1, 128], strides = [1, 1]} : vector<8x128xf32> to vector<1x128xf32>
    %7 = vector.extract_strided_slice %5 {offsets = [1, 0], sizes = [1, 128], strides = [1, 1]} : vector<8x128xf32> to vector<1x128xf32>
    %8 = vector.extract_strided_slice %5 {offsets = [2, 0], sizes = [1, 128], strides = [1, 1]} : vector<8x128xf32> to vector<1x128xf32>
    %9 = tpu.iota {dimensions = array<i32: 1>} : vector<1x128xi32>
    %10 = vector.broadcast %1 : i32 to vector<1x128xi32>
    %11 = arith.cmpi slt, %9, %10 : vector<1x128xi32>
    %cst = arith.constant 3.40282347E+38 : f32
    %cst_2 = arith.constant -3.40282347E+38 : f32
    %12 = vector.broadcast %cst : f32 to vector<1x128xf32>
    %13 = vector.broadcast %cst_2 : f32 to vector<1x128xf32>
    %14 = arith.select %11, %12, %13 : vector<1x128xi1>, vector<1x128xf32>
    %15 = tpu.iota {dimensions = array<i32: 1>} : vector<1x32xi32>
    %c0_i32 = arith.constant 0 : i32
    %16 = vector.broadcast %c0_i32 : i32 to vector<1x32xi32>
    %c4_i32 = arith.constant 4 : i32
    %17 = arith.muli %c4_i32, %arg0 : i32
    %c1_i32 = arith.constant 1 : i32
    %c0_i32_3 = arith.constant 0 : i32
    %18 = arith.subi %3, %c1_i32 : i32
    %19 = arith.addi %c1_i32, %18 : i32
    %c1_i32_4 = arith.constant 1 : i32
    %20:3 = scf.for %arg6 = %c1_i32 to %19 step %c1_i32_4 iter_args(%arg7 = %14, %arg8 = %c0_i32_3, %arg9 = %16) -> (vector<1x128xf32>, i32, vector<1x32xi32>)  : i32 {
      %c0_i32_8 = arith.constant 0 : i32
      %23 = arith.addi %17, %c0_i32_8 : i32
      %24 = arith.index_cast %23 : i32 to index
      %25 = arith.index_cast %arg8 : i32 to index
      %26 = memref.load %arg3[%24, %25] : memref<8x128xf32, #tpu.memory_space<smem>>
      %c1_i32_9 = arith.constant 1 : i32
      %27 = arith.addi %17, %c1_i32_9 : i32
      %28 = arith.index_cast %27 : i32 to index
      %29 = arith.index_cast %arg8 : i32 to index
      %30 = memref.load %arg3[%28, %29] : memref<8x128xf32, #tpu.memory_space<smem>>
      %c2_i32 = arith.constant 2 : i32
      %31 = arith.addi %17, %c2_i32 : i32
      %32 = arith.index_cast %31 : i32 to index
      %33 = arith.index_cast %arg8 : i32 to index
      %34 = memref.load %arg3[%32, %33] : memref<8x128xf32, #tpu.memory_space<smem>>
      %35 = vector.broadcast %26 : f32 to vector<1x128xf32>
      %36 = arith.subf %6, %35 : vector<1x128xf32>
      %37 = vector.broadcast %30 : f32 to vector<1x128xf32>
      %38 = arith.subf %7, %37 : vector<1x128xf32>
      %39 = vector.broadcast %34 : f32 to vector<1x128xf32>
      %40 = arith.subf %8, %39 : vector<1x128xf32>
      %41 = arith.mulf %36, %36 : vector<1x128xf32>
      %42 = arith.mulf %38, %38 : vector<1x128xf32>
      %43 = arith.addf %41, %42 : vector<1x128xf32>
      %44 = arith.mulf %40, %40 : vector<1x128xf32>
      %45 = arith.addf %43, %44 : vector<1x128xf32>
      %46 = arith.minimumf %arg7, %45 : vector<1x128xf32>
      %cst_10 = arith.constant dense<0xFF800000> : vector<1xf32>
      %47 = vector.multi_reduction <maximumf>, %46, %cst_10 [1] : vector<1x128xf32> to vector<1xf32>
      %48 = vector.shape_cast %47 : vector<1xf32> to vector<1x1xf32>
      %49 = vector.broadcast %48 : vector<1x1xf32> to vector<1x128xf32>
      %50 = arith.cmpf oeq, %46, %49 : vector<1x128xf32>
      %c128_i32 = arith.constant 128 : i32
      %51 = vector.broadcast %c128_i32 : i32 to vector<1x128xi32>
      %52 = arith.select %50, %9, %51 : vector<1x128xi1>, vector<1x128xi32>
      %cst_11 = arith.constant dense<2147483647> : vector<1xi32>
      %53 = vector.multi_reduction <minsi>, %52, %cst_11 [1] : vector<1x128xi32> to vector<1xi32>
      %54 = vector.shape_cast %53 : vector<1xi32> to vector<1x1xi32>
      %55 = vector.extract %54[0, 0] : i32 from vector<1x1xi32>
      %56 = vector.broadcast %arg6 : i32 to vector<1x32xi32>
      %57 = arith.cmpi eq, %15, %56 : vector<1x32xi32>
      %58 = vector.broadcast %55 : i32 to vector<1x32xi32>
      %59 = arith.select %57, %58, %arg9 : vector<1x32xi1>, vector<1x32xi32>
      scf.yield %46, %55, %59 : vector<1x128xf32>, i32, vector<1x32xi32>
    }
    %21 = vector.shape_cast %20#2 : vector<1x32xi32> to vector<1x1x32xi32>
    %c0_5 = arith.constant 0 : index
    %c0_6 = arith.constant 0 : index
    %c0_7 = arith.constant 0 : index
    %22 = vector.load %arg5[%c0_5, %c0_6, %c0_7] : memref<1x1x32xi32, #tpu.memory_space<vmem>>, vector<1x1x32xi32>
    tpu.vector_store %arg5[%c0_5, %c0_6, %c0_7], %21 {strides = array<i32>} : memref<1x1x32xi32, #tpu.memory_space<vmem>>, vector<1x1x32xi32>,
    return
  }
  func.func @transform_0(%arg0: i32, %arg1: memref<2xi32, #tpu.memory_space<smem>>, %arg2: memref<2xi32, #tpu.memory_space<smem>>, %arg3: memref<8x128xf32, #tpu.memory_space<smem>>) -> (i32, i32, i32) {
    %c0_i32 = arith.constant 0 : i32
    %c0_i32_0 = arith.constant 0 : i32
    %c0_i32_1 = arith.constant 0 : i32
    return %arg0, %c0_i32, %c0_i32_0 : i32, i32, i32
  }
  func.func @transform_1(%arg0: i32, %arg1: memref<2xi32, #tpu.memory_space<smem>>, %arg2: memref<2xi32, #tpu.memory_space<smem>>, %arg3: memref<8x128xf32, #tpu.memory_space<smem>>) -> (i32, i32, i32) {
    %c0_i32 = arith.constant 0 : i32
    %c0_i32_0 = arith.constant 0 : i32
    %c0_i32_1 = arith.constant 0 : i32
    return %arg0, %c0_i32, %c0_i32_0 : i32, i32, i32
  }
}

</mosaic_0001>

<llo_original>
// kernel: tpu_custom_call.1
$region0: #{tpu_custom_call.1}
  #allocation0 [shape = 'u32[]', space=smem, size = 0x4, offset = 0x4, fixed_abs, tag = 'smem constant byte address 0x4 - core index']
  #allocation1 [shape = 'u32[144,128]{1,0:T(1,128)}', space=vmem, size = 0x12000, scoped, tag = 'internal scratch']
  #allocation2 [shape = 's32[1]{0}', space=sflag, size = 0x4, scoped, tag = 'scoped memory for tpu_custom_call.1']
  #allocation3 [shape = 'u8[512]{0}', space=smem, size = 0x200, scoped, tag = 'prefetched SMEM operand 0']
  #allocation4 [shape = 'u8[512]{0}', space=smem, size = 0x200, scoped, tag = 'prefetched SMEM operand 1']
  #allocation5 [shape = 'u8[4096]{0}', space=smem, size = 0x1000, scoped, tag = 'prefetched SMEM operand 2']
  %s0 = inlined_call_operand.hbm [shape: s32[2], index: 0, kind: input, shape index: {}]
  %s1 = inlined_call_operand.vmem [shape: s32[2], index: 1, kind: input, shape index: {}]
  %s2 = inlined_call_operand.hbm [shape: f32[8,128], index: 2, kind: input, shape index: {}]
  %s3 = inlined_call_operand.hbm [shape: f32[2,8,128], index: 3, kind: input, shape index: {}]
  %s4 = inlined_call_operand.hbm [shape: s32[2,1,32], index: 4, kind: output, shape index: {}]
  %s5 = sld [smem:[#allocation0]]
  $region48: #{tpu_custom_call.1} parent=0
    _
  %s7 = ssub.s32 1, %s5
  %s8 = scalar_select 0, %s7, %s5
  %10 = dma.hbm_to_smem %s0, 16, [#allocation3], [#allocation2]
  %s11 = sshll.u32 %s1, 4
  %s12 = int_to_ptr.vmem [resolvable:$true] %s11
  %14 = dma.vmem_to_smem %s12, 16, [#allocation4], [#allocation2]
  %16 = dma.hbm_to_smem %s2, 128, [#allocation5], [#allocation2]
  %17 = dma.done [#allocation2], 160
  %18 = sfence
  $region1: #{tpu_custom_call.1} parent=0
    #allocation6 [shape = 'u8[8192]{0}', space=vmem, size = 0x2000, scoped, tag = 'input window, operand 3']
    #allocation7 [shape = 's32[2]{0}', space=sflag, size = 0x8, scoped, tag = 'scoped memory for tpu_custom_call.1']
    #allocation8 [shape = 's32[2]{0}', space=sflag, size = 0x8, scoped, tag = 'scoped memory for tpu_custom_call.1']
    #allocation9 [shape = 'u8[1024]{0}', space=vmem, size = 0x400, scoped, tag = 'output window, operand 0']
    %19 = vsyncpa [#allocation7], 0
    %s20 = scalar_lea.sflag [#allocation7], 1
    %21 = vsyncpa %s20, 0
    %22 = vsyncpa [#allocation8], 0
    %s23 = scalar_lea.sflag [#allocation8], 1
    %24 = vsyncpa %s23, 0
    loop: start=0, step=1, limit=4
    $region2: #{tpu_custom_call.1} parent=1 // loop_pre_header
      _
    $region3: #{tpu_custom_call.1} parent=1 // loop_header
      %s26 = sphi 0, %s30
      %p27 = scmp.ge.s32.totalorder %s26, 4
      %s36 = sphi 0, %s38
      %s39 = sphi 0, %s36
      %s40 = sphi 0, %s39
      %s56 = sphi 0, %s40
      %s62 = sphi 0, %s64
      %s65 = sphi 0, %s62
      %s66 = sphi 0, %s65
      %s82 = sphi 0, %s66
    $region4: #{tpu_custom_call.1} parent=1 // loop_header_branch
      %29 = sbr.rel (%p27) target = $region8
    $region5: #{tpu_custom_call.1} parent=1 // loop_body
      %s31 = ssub.s32 %s26, 1
      %s32 = ssub.s32 %s26, 2
      %s33 = sadd.s32 %s26, 1
      %s34 = ssub.s32 %s26, %s33
      %p35 = scmp.eq.s32.totalorder %s34, 0
      %s37 = sadd.s32 %s36, 1
      %s38 = scalar_select %p35, %s36, %s37
      %p41 = pneg %p35
      %p42 = scmp.eq.s32.totalorder %s26, 1
      %p43 = por %p41, %p42
      %p44 = scmp.ne.s32.totalorder %s36, %s39
      %p45 = scmp.eq.s32.totalorder %s26, 0
      %p46 = por %p44, %p45
      %p47 = scmp.ne.s32.totalorder %s36, %s39
      %p48 = scmp.eq.s32.totalorder %s31, 1
      %p49 = por %p47, %p48
      %p50 = scmp.ne.s32.totalorder %s39, %s40
      %p51 = scmp.eq.s32.totalorder %s31, 0
      %p52 = por %p50, %p51
      %p53 = scmp.ne.s32.totalorder %s39, %s40
      %p54 = scmp.eq.s32.totalorder %s32, 1
      %p55 = por %p53, %p54
      %p57 = scmp.ne.s32.totalorder %s40, %s56
      %p58 = scmp.eq.s32.totalorder %s32, 0
      %p59 = por %p57, %p58
      %s60 = ssub.s32 %s26, %s33
      %p61 = scmp.eq.s32.totalorder %s60, 0
      %s63 = sadd.s32 %s62, 1
      %s64 = scalar_select %p61, %s62, %s63
      %p67 = pneg %p61
      %p68 = scmp.eq.s32.totalorder %s26, 1
      %p69 = por %p67, %p68
      %p70 = scmp.ne.s32.totalorder %s62, %s65
      %p71 = scmp.eq.s32.totalorder %s26, 0
      %p72 = por %p70, %p71
      %p73 = scmp.ne.s32.totalorder %s62, %s65
      %p74 = scmp.eq.s32.totalorder %s31, 1
      %p75 = por %p73, %p74
      %p76 = scmp.ne.s32.totalorder %s65, %s66
      %p77 = scmp.eq.s32.totalorder %s31, 0
      %p78 = por %p76, %p77
      %p79 = scmp.ne.s32.totalorder %s65, %s66
      %p80 = scmp.eq.s32.totalorder %s32, 1
      %p81 = por %p79, %p80
      %p83 = scmp.ne.s32.totalorder %s66, %s82
      %p84 = scmp.eq.s32.totalorder %s32, 0
      %p85 = por %p83, %p84
      %p86 = scmp.le.s32.totalorder 1, %s26
      %p87 = scmp.lt.s32.totalorder %s26, 3
      %p88 = pnand %p86, %p87
      %p89 = pneg %p88
      // Predicated region
      $region9: #{tpu_custom_call.1} parent=5 // pred_check
        _
      $region10: #{tpu_custom_call.1} parent=5 // pred_check_branch
        %91 = sbr.rel (%p88) target = $region12
      $region11: #{tpu_custom_call.1} parent=5 // pred_region
        %s92 = ssub.s32 %s26, 1
      $region12: #{tpu_custom_call.1} parent=5 // pred_fallthru
        _
      %p93 = scmp.lt.s32.totalorder %s26, 2
      // Predicated region
      $region13: #{tpu_custom_call.1} parent=5 // pred_check
        %p94 = pneg %p93
      $region14: #{tpu_custom_call.1} parent=5 // pred_check_branch
        %96 = sbr.rel (%p94) target = $region16
      $region15: #{tpu_custom_call.1} parent=5 // pred_region
        // Predicated region
        $region17: #{tpu_custom_call.1} parent=15 // pred_check
          %p97 = pneg %p46
        $region18: #{tpu_custom_call.1} parent=15 // pred_check_branch
          %99 = sbr.rel (%p97) target = $region20
        $region19: #{tpu_custom_call.1} parent=15 // pred_region
          %s100 = sand.u32 %s36, 1
          %s101 = scalar_lea.sflag [#allocation7], %s100
          %s102 = sand.u32 %s36, 1
          %s103 = smul.addr %s102, 8
          %s104 = scalar_lea.vmem [#allocation6], %s103
          %s106 = ssub.s32 128, 128
          %107 = vsyncadd %s101, %s106
          %s108 = smul.addr %s26, 128
          %s109 = scalar_lea.hbm %s3, %s108
          %s111 = sshll.u32 %s104, 4
          %s112 = int_to_ptr.vmem [resolvable:$true] %s111
          %114 = dma.hbm_to_vmem [thread:$0]  %s109, 128, %s112, %s101
        $region20: #{tpu_custom_call.1} parent=15 // pred_fallthru
          _
      $region16: #{tpu_custom_call.1} parent=5 // pred_fallthru
        _
      %p115 = scmp.le.s32.totalorder 1, %s26
      %p116 = scmp.lt.s32.totalorder %s26, 3
      %p117 = pnand %p115, %p116
      %p118 = pneg %p117
      // Predicated region
      $region21: #{tpu_custom_call.1} parent=5 // pred_check
        _
      $region22: #{tpu_custom_call.1} parent=5 // pred_check_branch
        %120 = sbr.rel (%p117) target = $region24
      $region23: #{tpu_custom_call.1} parent=5 // pred_region
        %s121 = ssub.s32 %s26, 1
        %s122 = sand.u32 %s39, 1
        %s123 = scalar_lea.sflag [#allocation7], %s122
        %s124 = sand.u32 %s39, 1
        %s125 = smul.addr %s124, 8
        %s126 = scalar_lea.vmem [#allocation6], %s125
        // Predicated region
        $region25: #{tpu_custom_call.1} parent=23 // pred_check
          %p127 = pneg %p52
        $region26: #{tpu_custom_call.1} parent=23 // pred_check_branch
          %129 = sbr.rel (%p127) target = $region28
        $region27: #{tpu_custom_call.1} parent=23 // pred_region
          %130 = dma.done %s123, 128
        $region28: #{tpu_custom_call.1} parent=23 // pred_fallthru
          _
        %s131 = sand.u32 %s39, 1
        %s132 = scalar_lea.sflag [#allocation7], %s131
        %s133 = sand.u32 %s39, 1
        %s134 = smul.addr %s133, 8
        %s135 = scalar_lea.vmem [#allocation6], %s134
        %p136 = pneg %p52
        %p137 = pneg %p49
        %p138 = pneg %p78
        %p139 = pneg %p75
        %s140 = sand.u32 %s65, 1
        %s141 = scalar_lea.sflag [#allocation8], %s140
        %s142 = sand.u32 %s65, 1
        %s143 = scalar_lea.vmem [#allocation9], %s142
        %s144 = sld [smem:[#allocation3 + %s31]]
        %s145 = sld [smem:[#allocation4 + %s31]]
        %v146 = vld [vmem:[%s126] sm:$0xff]
        %v147 = vlaneseq
        %v148 = vand.u32 %v147, 127
        %v149 = vstv %s144
        %vm150 = vcmp.lt.s32.totalorder %v148, %v149
        %v151 = vsel %vm150, 3.4028235e+38, -3.4028235e+38
        %s152 = smul.u32 %s31, 4
        // While loop
        $region29: #{tpu_custom_call.1} parent=23 // loop_pre_header
          _
        $region30: #{tpu_custom_call.1} parent=23 // loop_header
          %s154 = sphi 1, %s156
          %p155 = scmp.ge.s32.totalorder %s154, %s145
          %v159 = vphi %v151, %v197
          %s160 = sphi 0, %s219
          %v161 = vphi 0, %v223
        $region31: #{tpu_custom_call.1} parent=23 // loop_header_branch
          %158 = sbr.rel (%p155) target = $region35
        $region32: #{tpu_custom_call.1} parent=23 // loop_body
          %s162 = sshra.s32 %s160, 7
          %s163 = sand.u32 %s160, 127
          %s164 = sadd.s32 %s162, %s152
          %s165 = smul.u32 %s164, 128
          %s166 = sshra.s32 %s160, 7
          %s167 = sand.u32 %s160, 127
          %s168 = sadd.s32 %s165, %s167
          %s169 = sld [smem:[#allocation5 + %s168]]
          %s170 = sadd.s32 %s152, 1
          %s171 = sadd.s32 %s162, %s170
          %s172 = smul.u32 %s171, 128
          %s173 = sadd.s32 %s172, %s167
          %s174 = sld [smem:[#allocation5 + %s173]]
          %s175 = sadd.s32 %s152, 2
          %s176 = sadd.s32 %s162, %s175
          %s177 = smul.u32 %s176, 128
          %s178 = sadd.s32 %s177, %s167
          %s179 = sld [smem:[#allocation5 + %s178]]
          %v180 = vstv %s169
          %v181 = vsub.f32 %v146, %v180
          %v182 = vstv %s174
          %v183 = vsub.f32 %v146, %v182
          %v184 = vstv %s179
          %v185 = vsub.f32 %v146, %v184
          %v186 = vmul.f32 %v181, %v181
          %v187 = vmul.f32 %v183, %v183
          %v189 = vrot.slane %v187, 1
          %v191 = vadd.f32 %v186, %v189
          %v192 = vmul.f32 %v185, %v185
          %v194 = vrot.slane %v192, 2
          %v196 = vadd.f32 %v191, %v194
          %v197 = vmin.f32 %v159, %v196
          %vm198 = vcmask 1040384
          %v199 = vsel %vm198, %v197, -inf
          %200 = vmax.xlane.f32.xlu0 %v199
          %v201 = vpop.xlane.xlu0 %200
          %vm202 = vcmp.eq.f32.partialorder %v197, %v201
          %v203 = vsel %vm202, %v148, 128
          %v204 = vsel %vm198, %v203, 2147483647
          %v205 = vand.u32 %v204, 65535
          %v206 = vshra.s32 %v204, 16
          %v207 = vcvt.s32.f32 %v205
          %v208 = vcvt.s32.f32 %v206
          %209 = vmin.xlane.f32.xlu0 %v208
          %v210 = vpop.xlane.xlu0 %209
          %vm211 = vcmp.eq.f32.partialorder %v208, %v210
          %v212 = vsel %vm211, %v207, inf
          %213 = vmin.xlane.f32.xlu0 %v212
          %v214 = vpop.xlane.xlu0 %213
          %v215 = vcvt.f32.s32 %v214
          %v216 = vcvt.f32.s32 %v210
          %v217 = vshll.u32 %v216, 16
          %v218 = vadd.s32 %v217, %v215
          %s219 = vtos %v218
          %v220 = vstv %s154
          %vm221 = vcmp.eq.s32.totalorder %v148, %v220
          %v222 = vstv %s219
          %v223 = vsel %vm221, %v222, %v161
        $region33: #{tpu_custom_call.1} parent=23 // loop_footer
          %s156 = sadd.s32 %s154, 1
        $region34: #{tpu_custom_call.1} parent=23 // loop_footer_branch
          %153 = sbr.rel target = $region30
        $region35: #{tpu_custom_call.1} parent=23 // loop_exit
          _
        %vm224 = vcmask 253952
        %225 = vst.msk [vmem:[%s143] sm:$0x1] %vm224, %v161
        %s226 = sand.u32 %s65, 1
        %s227 = scalar_lea.sflag [#allocation8], %s226
        %s228 = sand.u32 %s65, 1
        %s229 = scalar_lea.vmem [#allocation9], %s228
        // Predicated region
        $region36: #{tpu_custom_call.1} parent=23 // pred_check
          %p230 = pneg %p75
        $region37: #{tpu_custom_call.1} parent=23 // pred_check_branch
          %232 = sbr.rel (%p230) target = $region39
        $region38: #{tpu_custom_call.1} parent=23 // pred_region
          %s234 = ssub.s32 16, 16
          %235 = vsyncadd %s227, %s234
          %s236 = smul.addr %s31, 16
          %s237 = scalar_lea.hbm %s4, %s236
          %s239 = sshll.u32 %s229, 4
          %s240 = int_to_ptr.vmem [resolvable:$true] %s239
          %242 = dma.vmem_to_hbm [thread:$0]  %s240, 16, %s237, %s227
        $region39: #{tpu_custom_call.1} parent=23 // pred_fallthru
          _
      $region24: #{tpu_custom_call.1} parent=5 // pred_fallthru
        _
      %p243 = scmp.le.s32.totalorder 2, %s26
      // Predicated region
      $region40: #{tpu_custom_call.1} parent=5 // pred_check
        %p244 = pneg %p243
      $region41: #{tpu_custom_call.1} parent=5 // pred_check_branch
        %246 = sbr.rel (%p244) target = $region43
      $region42: #{tpu_custom_call.1} parent=5 // pred_region
        %s247 = ssub.s32 %s26, 2
        // Predicated region
        $region44: #{tpu_custom_call.1} parent=42 // pred_check
          %p248 = pneg %p81
        $region45: #{tpu_custom_call.1} parent=42 // pred_check_branch
          %250 = sbr.rel (%p248) target = $region47
        $region46: #{tpu_custom_call.1} parent=42 // pred_region
          %s251 = sand.u32 %s66, 1
          %s252 = scalar_lea.sflag [#allocation8], %s251
          %s253 = sand.u32 %s66, 1
          %s254 = scalar_lea.vmem [#allocation9], %s253
          %255 = dma.done %s252, 16
        $region47: #{tpu_custom_call.1} parent=42 // pred_fallthru
          _
      $region43: #{tpu_custom_call.1} parent=5 // pred_fallthru
        _
    $region6: #{tpu_custom_call.1} parent=1 // loop_footer
      %s30 = sadd.s32 1, %s26
    $region7: #{tpu_custom_call.1} parent=1 // loop_footer_branch
      %25 = sbr.rel target = $region3
    $region8: #{tpu_custom_call.1} parent=1 // loop_exit
      _
    %256 = vsyncpa [#allocation7], 1
    %s257 = scalar_lea.sflag [#allocation7], 1
    %258 = vsyncpa %s257, 1
    %259 = vsyncpa [#allocation8], 1
    %s260 = scalar_lea.sflag [#allocation8], 1
    %261 = vsyncpa %s260, 1

</llo_original>
